<compile_context>
chip_gen: v7x
topology: tpu7x:2x2x1
jax: 0.10.0
libtpu: 0.0.40
codegen_flags: <defaults>
</compile_context>

<pallas_src>
import functools

import jax
import jax.numpy as jnp
from jax import lax
from jax.experimental import pallas as pl
from jax.experimental.pallas import tpu as pltpu

_LANE = 128              # lane width: pad matmul N dims so every store is unmasked / lane-dense
_MAX_BATCH_TILE = 1024   # rows per grid step (multiple of 8); <3 MiB double-buffered VMEM


def _round_up(x, m):
    return ((x + m - 1) // m) * m


def _pick_batch_tile(batch):
    """Rows per grid step.

    - Tiny batches (<= 8): one full-array block (always a legal block shape).
    - Otherwise aim for >= 2 grid steps so dimension_semantics=("parallel",)
      can shard batch tiles across both TensorCores on v7x, capped at
      _MAX_BATCH_TILE so per-step work amortizes the ~0.35us grid overhead.
    """
    if batch <= 8:
        return batch
    return min(_MAX_BATCH_TILE, _round_up(pl.cdiv(batch, 2), 8))


def _mlp_body(x_ref, w1_ref, b1_ref, w2_ref, b2_ref, precision):
    # y = relu(x @ W1 + b1) @ W2 + b2   (Dropout(p=0) == Identity)
    h = jnp.dot(x_ref[...], w1_ref[...],
                preferred_element_type=jnp.float32, precision=precision)
    h = jnp.maximum(h + b1_ref[...], 0.0)            # bias + ReLU in f32 on the VPU
    # TODO(synk): 'sigmoid'/'tanh'/'softmax' activations and Dropout(p>0) not implemented.
    out = jnp.dot(h.astype(w2_ref.dtype), w2_ref[...],
                  preferred_element_type=jnp.float32, precision=precision)
    return out + b2_ref[...]


def _qnetwork_kernel(x_ref, w1_ref, b1_ref, w2_ref, b2_ref, o_ref, *, precision):
    o_ref[...] = _mlp_body(x_ref, w1_ref, b1_ref, w2_ref, b2_ref, precision).astype(o_ref.dtype)


def _qnetwork_argmax_kernel(x_ref, w1_ref, b1_ref, w2_ref, b2_ref, a_ref, *,
                            out_dim, precision):
    # Fused downstream consumer: greedy DQN action = argmax_a Q(s, a).
    q = _mlp_body(x_ref, w1_ref, b1_ref, w2_ref, b2_ref, precision)
    lane = lax.broadcasted_iota(jnp.int32, q.shape, dimension=1)
    q = jnp.where(lane < out_dim, q, -jnp.inf)        # ignore zero-padding lanes
    q_max = jnp.max(q, axis=-1, keepdims=True)
    # First index attaining the max (matches torch.argmax tie-breaking).
    idx = jnp.min(jnp.where(q == q_max, lane, q.shape[-1]), axis=-1, keepdims=True)
    a_ref[...] = idx.astype(jnp.int32)


def prepare_qnetwork_params(w1, b1, w2, b2, compute_dtype=jnp.float32):
    """One-time (off the hot path) re-layout of PyTorch-style Linear params.

    w1: (hidden, in), b1: (hidden,), w2: (out, hidden), b2: (out,)
    Weights are transposed to (in, out) layout and zero-padded so every matmul
    output dim is a multiple of 128 (lane-dense stores), optionally cast to
    bfloat16.  Biases stay f32 (VPU-side math runs in f32 on all chips).
    """
    hidden_dim, input_dim = w1.shape
    out_dim = w2.shape[0]
    hidden_pad = _round_up(hidden_dim, _LANE)
    out_pad = _round_up(out_dim, _LANE)

    w1_t = (jnp.zeros((input_dim, hidden_pad), compute_dtype)
            .at[:, :hidden_dim].set(jnp.asarray(w1, compute_dtype).T))
    w2_t = (jnp.zeros((hidden_pad, out_pad), compute_dtype)
            .at[:hidden_dim, :out_dim].set(jnp.asarray(w2, compute_dtype).T))
    b1_p = jnp.zeros((1, hidden_pad), jnp.float32).at[0, :hidden_dim].set(
        jnp.asarray(b1, jnp.float32))
    b2_p = jnp.zeros((1, out_pad), jnp.float32).at[0, :out_dim].set(
        jnp.asarray(b2, jnp.float32))

    precision = (lax.Precision.HIGHEST
                 if jnp.dtype(compute_dtype) == jnp.dtype(jnp.float32)
                 else lax.Precision.DEFAULT)
    meta = dict(input_dim=input_dim, hidden_pad=hidden_pad, out_pad=out_pad,
                out_dim=out_dim, precision=precision)
    return (w1_t, b1_p, w2_t, b2_p), meta


def _common_call(kernel, x, params, meta, out_cols, out_dtype):
    w1_t, b1_p, w2_t, b2_p = params
    batch, input_dim = x.shape
    assert input_dim == meta["input_dim"], "input feature dim mismatch"
    hidden_pad, out_pad = meta["hidden_pad"], meta["out_pad"]

    if x.dtype != w1_t.dtype:
        # Hot-path callers should pass x already in the compute dtype; this
        # cast only exists to keep kernel inputs uniform.
        x = x.astype(w1_t.dtype)

    tb = _pick_batch_tile(batch)
    grid = (pl.cdiv(batch, tb),)

    itemsize = jnp.dtype(w1_t.dtype).itemsize
    flops = 2 * batch * (input_dim * hidden_pad + hidden_pad * out_pad)
    bytes_accessed = int(itemsize * (x.size + w1_t.size + w2_t.size)
                         + 4 * (b1_p.size + b2_p.size)
                         + jnp.dtype(out_dtype).itemsize * batch * out_cols)

    return pl.pallas_call(
        kernel,
        out_shape=jax.ShapeDtypeStruct((batch, out_cols), out_dtype),
        grid_spec=pltpu.PrefetchScalarGridSpec(
            num_scalar_prefetch=0,
            grid=grid,
            in_specs=[
                pl.BlockSpec((tb, input_dim), lambda i: (i, 0)),          # x tile (streamed)
                pl.BlockSpec((input_dim, hidden_pad), lambda i: (0, 0)),  # W1 (VMEM-resident)
                pl.BlockSpec((1, hidden_pad), lambda i: (0, 0)),          # b1 (resident)
                pl.BlockSpec((hidden_pad, out_pad), lambda i: (0, 0)),    # W2 (resident)
                pl.BlockSpec((1, out_pad), lambda i: (0, 0)),             # b2 (resident)
            ],
            out_specs=pl.BlockSpec((tb, out_cols), lambda i: (i, 0)),
        ),
        compiler_params=pltpu.CompilerParams(
            dimension_semantics=("parallel",),   # >=2 steps when batch>8 -> both TCs on v7x
        ),
        cost_estimate=pl.CostEstimate(flops=flops, transcendentals=0,
                                      bytes_accessed=bytes_accessed),
    )(x, w1_t, b1_p, w2_t, b2_p)


def qnetwork_forward(x, params, meta, *, pad_output=False):
    """x: (B, input_dim) -> (B, out_dim) Q-values.

    pad_output=True returns the lane-padded (B, out_pad) kernel output directly
    (columns >= out_dim are zero), skipping the extra slice dispatch + HBM
    round trip when the consumer can index valid columns itself.
    """
    kernel = functools.partial(_qnetwork_kernel, precision=meta["precision"])
    out_padded = _common_call(kernel, x, params, meta, meta["out_pad"], jnp.float32)
    if pad_output:
        return out_padded
    return out_padded[:, :meta["out_dim"]]


def qnetwork_forward_argmax(x, params, meta):
    """Fused forward + argmax over Q (greedy DQN action selection): (B,) int32."""
    kernel = functools.partial(_qnetwork_argmax_kernel,
                               out_dim=meta["out_dim"], precision=meta["precision"])
    actions = _common_call(kernel, x, params, meta, 1, jnp.int32)
    return actions[:, 0]


def init_qnetwork_params(key, input_dim, hidden_dim, out_dim, dtype=jnp.float32):
    """Deterministic init mimicking nn.Linear's U(-1/sqrt(fan_in), 1/sqrt(fan_in))."""
    k1, k2, k3, k4 = jax.random.split(key, 4)
    bound1 = 1.0 / jnp.sqrt(jnp.asarray(input_dim, dtype))
    bound2 = 1.0 / jnp.sqrt(jnp.asarray(hidden_dim, dtype))
    w1 = jax.random.uniform(k1, (hidden_dim, input_dim), dtype, -bound1, bound1)
    b1 = jax.random.uniform(k2, (hidden_dim,), dtype, -bound1, bound1)
    w2 = jax.random.uniform(k3, (out_dim, hidden_dim), dtype, -bound2, bound2)
    b2 = jax.random.uniform(k4, (out_dim,), dtype, -bound2, bound2)
    return w1, b1, w2, b2


if __name__ == "__main__":
    # Small shapes consistent with the module: a batch of flat state vectors.
    batch, input_dim, hidden_dim, out_dim = 2, 8, 32, 4

    key = jax.random.PRNGKey(0)
    kx, kp, kb = jax.random.split(key, 3)
    x = jax.random.normal(kx, (batch, input_dim), dtype=jnp.float32)
    w1, b1, w2, b2 = init_qnetwork_params(kp, input_dim, hidden_dim, out_dim)

    def torch_ref(xs):  # same math as the PyTorch module (fp32)
        return jnp.maximum(xs @ w1.T + b1, 0.0) @ w2.T + b2

    # Parameter re-layout happens exactly once, outside the forward hot path.
    params, meta = prepare_qnetwork_params(w1, b1, w2, b2)

    # Small batch (grid=1, full-array block).
    out = jax.block_until_ready(qnetwork_forward(x, params, meta))
    assert out.shape == (batch, out_dim)
    assert jnp.allclose(out, torch_ref(x), atol=1e-5, rtol=1e-5)

    # Padded-output path (no extra slice dispatch); padding lanes are zero.
    out_pad = jax.block_until_ready(qnetwork_forward(x, params, meta, pad_output=True))
    assert out_pad.shape == (batch, meta["out_pad"])
    assert jnp.allclose(out_pad[:, :out_dim], torch_ref(x), atol=1e-5, rtol=1e-5)
    assert jnp.allclose(out_pad[:, out_dim:], 0.0)

    # Multi-tile batch grid (512 -> two 256-row tiles; both TCs on v7x).
    xb = jax.random.normal(kb, (512, input_dim), dtype=jnp.float32)
    out_b = jax.block_until_ready(qnetwork_forward(xb, params, meta))
    assert out_b.shape == (512, out_dim)
    assert jnp.allclose(out_b, torch_ref(xb), atol=1e-4, rtol=1e-5)

    # Partial final tile (300 -> tiles of 152 rows, second tile ragged).
    xr = xb[:300]
    out_r = jax.block_until_ready(qnetwork_forward(xr, params, meta))
    assert out_r.shape == (300, out_dim)
    assert jnp.allclose(out_r, torch_ref(xr), atol=1e-4, rtol=1e-5)

    # Fused forward + argmax epilogue (greedy action selection, no slice/argmax dispatch).
    acts = jax.block_until_ready(qnetwork_forward_argmax(xr, params, meta))
    assert acts.shape == (300,)
    assert jnp.array_equal(acts, jnp.argmax(torch_ref(xr), axis=-1).astype(jnp.int32))

    # bf16 compute path: halved x/weight DMA bytes, single-pass MXU; bias/ReLU in f32.
    params16, meta16 = prepare_qnetwork_params(w1, b1, w2, b2, compute_dtype=jnp.bfloat16)
    out16 = jax.block_until_ready(qnetwork_forward(xb, params16, meta16))
    assert jnp.allclose(out16, torch_ref(xb), atol=5e-2, rtol=5e-2)

    print("KERNEL_OK")
</pallas_src>

<mosaic_0001>
module attributes {stable_mosaic.version = 11 : i64} {
  func.func @_qnetwork_kernel(%arg0: i32, %arg1: memref<2x8xf32, #tpu.memory_space<vmem>>, %arg2: memref<8x128xf32, #tpu.memory_space<vmem>>, %arg3: memref<1x128xf32, #tpu.memory_space<vmem>>, %arg4: memref<128x128xf32, #tpu.memory_space<vmem>>, %arg5: memref<1x128xf32, #tpu.memory_space<vmem>>, %arg6: memref<2x128xf32, #tpu.memory_space<vmem>>) attributes {dimension_semantics = [#tpu.dimension_semantics<parallel>], iteration_bounds = array<i64: 1>, scalar_prefetch = 0 : i64, scratch_operands = 0 : i64, tpu.core_type = #tpu.core_type<tc>, window_params = [{transform_indices = @transform_0, window_bounds = array<i64: 2, 8>}, {pipeline_mode = #tpu.pipeline_mode<synchronous>, transform_indices = @transform_1, window_bounds = array<i64: 8, 128>}, {pipeline_mode = #tpu.pipeline_mode<synchronous>, transform_indices = @transform_2, window_bounds = array<i64: 1, 128>}, {pipeline_mode = #tpu.pipeline_mode<synchronous>, transform_indices = @transform_3, window_bounds = array<i64: 128, 128>}, {pipeline_mode = #tpu.pipeline_mode<synchronous>, transform_indices = @transform_4, window_bounds = array<i64: 1, 128>}, {transform_indices = @transform_5, window_bounds = array<i64: 2, 128>}]} {
    %c0 = arith.constant 0 : index
    %c0_0 = arith.constant 0 : index
    %0 = vector.load %arg1[%c0, %c0_0] : memref<2x8xf32, #tpu.memory_space<vmem>>, vector<2x8xf32>
    %c0_1 = arith.constant 0 : index
    %c0_2 = arith.constant 0 : index
    %1 = vector.load %arg2[%c0_1, %c0_2] : memref<8x128xf32, #tpu.memory_space<vmem>>, vector<8x128xf32>
    %cst = arith.constant dense<0.000000e+00> : vector<2x128xf32>
    %2 = tpu.matmul %0, %1, %cst {dimension_numbers = #tpu.dot_dimension_numbers<[1], [0], [0], [1], [0, 0, 1, 1], [], []>, precision = #tpu.contract_precision<fp32>} : vector<2x8xf32>, vector<8x128xf32>, vector<2x128xf32> -> vector<2x128xf32>
    %c0_3 = arith.constant 0 : index
    %c0_4 = arith.constant 0 : index
    %3 = vector.load %arg3[%c0_3, %c0_4] : memref<1x128xf32, #tpu.memory_space<vmem>>, vector<1x128xf32>
    %4 = vector.broadcast %3 : vector<1x128xf32> to vector<2x128xf32>
    %5 = arith.addf %2, %4 : vector<2x128xf32>
    %cst_5 = arith.constant 0.000000e+00 : f32
    %6 = vector.broadcast %cst_5 : f32 to vector<2x128xf32>
    %7 = arith.maximumf %5, %6 : vector<2x128xf32>
    %c0_6 = arith.constant 0 : index
    %c0_7 = arith.constant 0 : index
    %8 = vector.load %arg4[%c0_6, %c0_7] : memref<128x128xf32, #tpu.memory_space<vmem>>, vector<128x128xf32>
    %cst_8 = arith.constant dense<0.000000e+00> : vector<2x128xf32>
    %9 = tpu.matmul %7, %8, %cst_8 {dimension_numbers = #tpu.dot_dimension_numbers<[1], [0], [0], [1], [0, 0, 1, 1], [], []>, precision = #tpu.contract_precision<fp32>} : vector<2x128xf32>, vector<128x128xf32>, vector<2x128xf32> -> vector<2x128xf32>
    %c0_9 = arith.constant 0 : index
    %c0_10 = arith.constant 0 : index
    %10 = vector.load %arg5[%c0_9, %c0_10] : memref<1x128xf32, #tpu.memory_space<vmem>>, vector<1x128xf32>
    %11 = vector.broadcast %10 : vector<1x128xf32> to vector<2x128xf32>
    %12 = arith.addf %9, %11 : vector<2x128xf32>
    %c0_11 = arith.constant 0 : index
    %c0_12 = arith.constant 0 : index
    %13 = vector.load %arg6[%c0_11, %c0_12] : memref<2x128xf32, #tpu.memory_space<vmem>>, vector<2x128xf32>
    tpu.vector_store %arg6[%c0_11, %c0_12], %12 {strides = array<i32>} : memref<2x128xf32, #tpu.memory_space<vmem>>, vector<2x128xf32>,
    return
  }
  func.func @transform_0(%arg0: i32) -> (i32, i32) {
    %c0_i32 = arith.constant 0 : i32
    %c0_i32_0 = arith.constant 0 : i32
    return %arg0, %c0_i32 : i32, i32
  }
  func.func @transform_1(%arg0: i32) -> (i32, i32) {
    %c0_i32 = arith.constant 0 : i32
    %c0_i32_0 = arith.constant 0 : i32
    %c0_i32_1 = arith.constant 0 : i32
    return %c0_i32, %c0_i32_0 : i32, i32
  }
  func.func @transform_2(%arg0: i32) -> (i32, i32) {
    %c0_i32 = arith.constant 0 : i32
    %c0_i32_0 = arith.constant 0 : i32
    %c0_i32_1 = arith.constant 0 : i32
    return %c0_i32, %c0_i32_0 : i32, i32
  }
  func.func @transform_3(%arg0: i32) -> (i32, i32) {
    %c0_i32 = arith.constant 0 : i32
    %c0_i32_0 = arith.constant 0 : i32
    %c0_i32_1 = arith.constant 0 : i32
    return %c0_i32, %c0_i32_0 : i32, i32
  }
  func.func @transform_4(%arg0: i32) -> (i32, i32) {
    %c0_i32 = arith.constant 0 : i32
    %c0_i32_0 = arith.constant 0 : i32
    %c0_i32_1 = arith.constant 0 : i32
    return %c0_i32, %c0_i32_0 : i32, i32
  }
  func.func @transform_5(%arg0: i32) -> (i32, i32) {
    %c0_i32 = arith.constant 0 : i32
    %c0_i32_0 = arith.constant 0 : i32
    return %arg0, %c0_i32 : i32, i32
  }
}

</mosaic_0001>

<llo_original>
// kernel: tpu_custom_call.1
$region0: #{tpu_custom_call.1}
  #allocation0 [shape = 'u32[]', space=smem, size = 0x4, offset = 0x4, fixed_abs, tag = 'smem constant byte address 0x4 - core index']
  #allocation1 [shape = 'u32[144,128]{1,0:T(1,128)}', space=vmem, size = 0x12000, scoped, tag = 'internal scratch']
  %s0 = inlined_call_operand.hbm [shape: f32[2,8], index: 0, kind: input, shape index: {}]
  %s1 = inlined_call_operand.hbm [shape: f32[8,128], index: 1, kind: input, shape index: {}]
  %s2 = inlined_call_operand.vmem [shape: f32[1,128], index: 2, kind: input, shape index: {}]
  %s3 = inlined_call_operand.hbm [shape: f32[128,128], index: 3, kind: input, shape index: {}]
  %s4 = inlined_call_operand.vmem [shape: f32[1,128], index: 4, kind: input, shape index: {}]
  %s5 = inlined_call_operand.hbm [shape: f32[2,128], index: 5, kind: output, shape index: {}]
  %s6 = sld [smem:[#allocation0]]
  $region42: #{tpu_custom_call.1} parent=0
    _
  %s8 = ssub.s32 1, %s6
  %s9 = scalar_select 0, %s8, %s6
  $region1: #{tpu_custom_call.1} parent=0
    #allocation2 [shape = 'u8[1024]{0}', space=vmem, size = 0x400, scoped, tag = 'input window, operand 0, single buffered']
    #allocation3 [shape = 's32[1]{0}', space=sflag, size = 0x4, scoped, tag = 'scoped memory for tpu_custom_call.1']
    #allocation4 [shape = 's32[1]{0}', space=sflag, size = 0x4, scoped, tag = 'scoped memory for tpu_custom_call.1']
    #allocation5 [shape = 'u8[4096]{0}', space=vmem, size = 0x1000, scoped, tag = 'input window, operand 1, single buffered']
    #allocation6 [shape = 's32[1]{0}', space=sflag, size = 0x4, scoped, tag = 'scoped memory for tpu_custom_call.1']
    #allocation7 [shape = 'u8[65536]{0}', space=vmem, size = 0x10000, scoped, tag = 'input window, operand 3, single buffered']
    #allocation8 [shape = 'u8[1024]{0}', space=vmem, size = 0x400, scoped, tag = 'output window, operand 0, single buffered']
    %10 = vsyncpa [#allocation3], 0
    %11 = vsyncpa [#allocation6], 0
    %12 = vsyncpa [#allocation4], 0
    // Predicated region
    $region2: #{tpu_custom_call.1} parent=1 // pred_check
      _
    $region3: #{tpu_custom_call.1} parent=1 // pred_check_branch
      %14 = sbr.rel (0) target = $region5
    $region4: #{tpu_custom_call.1} parent=1 // pred_region
      %s16 = ssub.s32 32, 32
      %17 = vsyncadd [#allocation3], %s16
      %s19 = sshll.u32 [#allocation2], 4
      %s20 = int_to_ptr.vmem [resolvable:$true] %s19
      %22 = dma.hbm_to_vmem [thread:$0]  %s0, 32, %s20, [#allocation3]
    $region5: #{tpu_custom_call.1} parent=1 // pred_fallthru
      _
    // Predicated region
    $region6: #{tpu_custom_call.1} parent=1 // pred_check
      _
    $region7: #{tpu_custom_call.1} parent=1 // pred_check_branch
      %24 = sbr.rel (0) target = $region9
    $region8: #{tpu_custom_call.1} parent=1 // pred_region
      %s26 = ssub.s32 128, 128
      %27 = vsyncadd [#allocation6], %s26
      %s29 = sshll.u32 [#allocation5], 4
      %s30 = int_to_ptr.vmem [resolvable:$true] %s29
      %32 = dma.hbm_to_vmem [thread:$0]  %s1, 128, %s30, [#allocation6]
    $region9: #{tpu_custom_call.1} parent=1 // pred_fallthru
      _
    // Predicated region
    $region10: #{tpu_custom_call.1} parent=1 // pred_check
      _
    $region11: #{tpu_custom_call.1} parent=1 // pred_check_branch
      %34 = sbr.rel (0) target = $region13
    $region12: #{tpu_custom_call.1} parent=1 // pred_region
      _
    $region13: #{tpu_custom_call.1} parent=1 // pred_fallthru
      _
    // Predicated region
    $region14: #{tpu_custom_call.1} parent=1 // pred_check
      _
    $region15: #{tpu_custom_call.1} parent=1 // pred_check_branch
      %36 = sbr.rel (0) target = $region17
    $region16: #{tpu_custom_call.1} parent=1 // pred_region
      %s38 = ssub.s32 2048, 2048
      %39 = vsyncadd [#allocation6], %s38
      %s40 = sshll.u32 [#allocation7], 4
      %s41 = int_to_ptr.vmem [resolvable:$true] %s40
      %46 = dma.hbm_to_vmem [thread:$0]  %s3, 2048, %s41, [#allocation6], 128, 128, 8
    $region17: #{tpu_custom_call.1} parent=1 // pred_fallthru
      _
    // Predicated region
    $region18: #{tpu_custom_call.1} parent=1 // pred_check
      _
    $region19: #{tpu_custom_call.1} parent=1 // pred_check_branch
      %48 = sbr.rel (0) target = $region21
    $region20: #{tpu_custom_call.1} parent=1 // pred_region
      _
    $region21: #{tpu_custom_call.1} parent=1 // pred_fallthru
      _
    // Predicated region
    $region22: #{tpu_custom_call.1} parent=1 // pred_check
      _
    $region23: #{tpu_custom_call.1} parent=1 // pred_check_branch
      %50 = sbr.rel (0) target = $region25
    $region24: #{tpu_custom_call.1} parent=1 // pred_region
      %51 = dma.done [#allocation3], 32
    $region25: #{tpu_custom_call.1} parent=1 // pred_fallthru
      _
    // Predicated region
    $region26: #{tpu_custom_call.1} parent=1 // pred_check
      _
    $region27: #{tpu_custom_call.1} parent=1 // pred_check_branch
      %53 = sbr.rel (0) target = $region29
    $region28: #{tpu_custom_call.1} parent=1 // pred_region
      %54 = dma.done [#allocation6], 128
    $region29: #{tpu_custom_call.1} parent=1 // pred_fallthru
      _
    // Predicated region
    $region30: #{tpu_custom_call.1} parent=1 // pred_check
      _
    $region31: #{tpu_custom_call.1} parent=1 // pred_check_branch
      %56 = sbr.rel (0) target = $region33
    $region32: #{tpu_custom_call.1} parent=1 // pred_region
      %57 = dma.done [#allocation6], 2048
    $region33: #{tpu_custom_call.1} parent=1 // pred_fallthru
      _
    %v58 = vld [vmem:[#allocation2] sm:$0x3]
    %v59 = vld [vmem:[#allocation5] sm:$0xff]
    %v60 = vld [vmem:[%s2] sm:$0x1]
    %v62 = vlaneseq
    %v63 = vshrl.u32 %v62, 7
    %v64 = vsub.s32 0, %v63
    %v65 = vrot.slane %v60, %v64
    %vm67 = vcmask 64512
    %v69 = vsel %vm67, %v58, 0
    %71 = vmatprep.subr.mxu0 0.0
    %v72 = vand.u32 %v59, 4294901760
    %73 = vmatpush1.msra.mxu0 %v72
    %74 = vmatprep.subr.mxu0 0.0
    %75 = vmatpush1.msra.mxu0 0.0
    %76 = vmatprep.subr.mxu0 0.0
    %77 = vmatpush1.msra.mxu0 0.0
    %78 = vmatprep.subr.mxu0 0.0
    %79 = vmatpush1.msra.mxu0 0.0
    %80 = vmatprep.subr.mxu0 0.0
    %81 = vmatpush1.msra.mxu0 0.0
    %82 = vmatprep.subr.mxu0 0.0
    %83 = vmatpush1.msra.mxu0 0.0
    %84 = vmatprep.subr.mxu0 0.0
    %85 = vmatpush1.msra.mxu0 0.0
    %86 = vmatprep.subr.mxu0 0.0
    %87 = vmatpush1.msra.mxu0 0.0
    %88 = vmatprep.subr.mxu0 0.0
    %89 = vmatpush1.msra.mxu0 0.0
    %90 = vmatprep.subr.mxu0 0.0
    %91 = vmatpush1.msra.mxu0 0.0
    %92 = vmatprep.subr.mxu0 0.0
    %93 = vmatpush1.msra.mxu0 0.0
    %94 = vmatprep.subr.mxu0 0.0
    %95 = vmatpush1.msra.mxu0 0.0
    %96 = vmatprep.subr.mxu0 0.0
    %97 = vmatpush1.msra.mxu0 0.0
    %98 = vmatprep.subr.mxu0 0.0
    %99 = vmatpush1.msra.mxu0 0.0
    %100 = vmatprep.subr.mxu0 0.0
    %101 = vmatpush1.msra.mxu0 0.0
    %102 = vmatprep.subr.mxu0 0.0
    %103 = vmatpush1.msra.mxu0 0.0
    %104 = vmatprep.subr.mxu0 0.0
    %105 = vmatpush1.msra.mxu0 0.0
    %106 = vmatprep.subr.mxu0 0.0
    %107 = vmatpush1.msra.mxu0 0.0
    %108 = vmatprep.subr.mxu0 0.0
    %109 = vmatpush1.msra.mxu0 0.0
    %110 = vmatprep.subr.mxu0 0.0
    %111 = vmatpush1.msra.mxu0 0.0
    %112 = vmatprep.subr.mxu0 0.0
    %113 = vmatpush1.msra.mxu0 0.0
    %114 = vmatprep.subr.mxu0 0.0
    %115 = vmatpush1.msra.mxu0 0.0
    %116 = vmatprep.subr.mxu0 0.0
    %117 = vmatpush1.msra.mxu0 0.0
    %118 = vmatprep.subr.mxu0 0.0
    %119 = vmatpush1.msra.mxu0 0.0
    %120 = vmatprep.subr.mxu0 0.0
    %121 = vmatpush1.msra.mxu0 0.0
    %122 = vmatprep.subr.mxu0 0.0
    %123 = vmatpush1.msra.mxu0 0.0
    %124 = vmatprep.subr.mxu0 0.0
    %125 = vmatpush1.msra.mxu0 0.0
    %126 = vmatprep.subr.mxu0 0.0
    %127 = vmatpush1.msra.mxu0 0.0
    %128 = vmatprep.subr.mxu0 0.0
    %129 = vmatpush1.msra.mxu0 0.0
    %130 = vmatprep.subr.mxu0 0.0
    %131 = vmatpush1.msra.mxu0 0.0
    %132 = vmatprep.subr.mxu0 0.0
    %133 = vmatpush1.msra.mxu0 0.0
    %134 = vmatprep.subr.mxu0 0.0
    %135 = vmatpush1.msra.mxu0 0.0
    %136 = vmatprep.mubr.f32.mxu0 0.0
    %v137 = vand.u32 %v69, 4294901760
    %v138 = vsub.f32 %v69, %v137
    %v139 = vand.u32 %v138, 4294901760
    %v140 = vsub.f32 %v138, %v139
    %v141 = vand.u32 %v140, 4294901760
    %142 = vmatmul.mubr.f32.gmra.mrb[0].mxu0 %v141
    %v143 = vpop.f32.mrb[0].mxu0
    %v144 = vadd.f32 %v65, %v143
    %v145 = vpop.f32.mrb[0].mxu0
    %146 = vdwg.mxu0
    %147 = vmatprep.subr.mxu0 0.0
    %v148 = vand.u32 %v59, 4294901760
    %v149 = vsub.f32 %v59, %v148
    %v150 = vand.u32 %v149, 4294901760
    %v151 = vsub.f32 %v149, %v150
    %v152 = vand.u32 %v151, 4294901760
    %153 = vmatpush1.msra.mxu0 %v152
    %154 = vmatprep.subr.mxu0 0.0
    %155 = vmatpush1.msra.mxu0 0.0
    %156 = vmatprep.subr.mxu0 0.0
    %157 = vmatpush1.msra.mxu0 0.0
    %158 = vmatprep.subr.mxu0 0.0
    %159 = vmatpush1.msra.mxu0 0.0
    %160 = vmatprep.subr.mxu0 0.0
    %161 = vmatpush1.msra.mxu0 0.0
    %162 = vmatprep.subr.mxu0 0.0
    %163 = vmatpush1.msra.mxu0 0.0
    %164 = vmatprep.subr.mxu0 0.0
    %165 = vmatpush1.msra.mxu0 0.0
    %166 = vmatprep.subr.mxu0 0.0
    %167 = vmatpush1.msra.mxu0 0.0
    %168 = vmatprep.subr.mxu0 0.0
    %169 = vmatpush1.msra.mxu0 0.0
    %170 = vmatprep.subr.mxu0 0.0
    %171 = vmatpush1.msra.mxu0 0.0
    %172 = vmatprep.subr.mxu0 0.0
    %173 = vmatpush1.msra.mxu0 0.0
    %174 = vmatprep.subr.mxu0 0.0
    %175 = vmatpush1.msra.mxu0 0.0
    %176 = vmatprep.subr.mxu0 0.0
    %177 = vmatpush1.msra.mxu0 0.0
    %178 = vmatprep.subr.mxu0 0.0
    %179 = vmatpush1.msra.mxu0 0.0
    %180 = vmatprep.subr.mxu0 0.0
    %181 = vmatpush1.msra.mxu0 0.0
    %182 = vmatprep.subr.mxu0 0.0
    %183 = vmatpush1.msra.mxu0 0.0
    %184 = vmatprep.subr.mxu0 0.0
    %185 = vmatpush1.msra.mxu0 0.0
    %186 = vmatprep.subr.mxu0 0.0
    %187 = vmatpush1.msra.mxu0 0.0
    %188 = vmatprep.subr.mxu0 0.0
    %189 = vmatpush1.msra.mxu0 0.0
    %190 = vmatprep.subr.mxu0 0.0
    %191 = vmatpush1.msra.mxu0 0.0
    %192 = vmatprep.subr.mxu0 0.0
    %193 = vmatpush1.msra.mxu0 0.0
    %194 = vmatprep.subr.mxu0 0.0
    %195 = vmatpush1.msra.mxu0 0.0
    %196 = vmatprep.subr.mxu0 0.0
    %197 = vmatpush1.msra.mxu0 0.0
    %198 = vmatprep.subr.mxu0 0.0
    %199 = vmatpush1.msra.mxu0 0.0
    %200 = vmatprep.subr.mxu0 0.0
    %201 = vmatpush1.msra.mxu0 0.0
    %202 = vmatprep.subr.mxu0 0.0
    %203 = vmatpush1.msra.mxu0 0.0
    %204 = vmatprep.subr.mxu0 0.0
    %205 = vmatpush1.msra.mxu0 0.0
    %206 = vmatprep.subr.mxu0 0.0
    %207 = vmatpush1.msra.mxu0 0.0
    %208 = vmatprep.subr.mxu0 0.0
    %209 = vmatpush1.msra.mxu0 0.0
    %210 = vmatprep.subr.mxu0 0.0
    %211 = vmatpush1.msra.mxu0 0.0
    %212 = vmatprep.subr.mxu0 0.0
    %213 = vmatpush1.msra.mxu0 0.0
    %214 = vmatprep.subr.mxu0 0.0
    %215 = vmatpush1.msra.mxu0 0.0
    %216 = vmatprep.mubr.f32.mxu0 0.0
    %v217 = vand.u32 %v69, 4294901760
    %218 = vmatmul.mubr.f32.gmra.mrb[0].mxu0 %v217
    %v219 = vpop.f32.mrb[0].mxu0
    %v220 = vadd.f32 %v144, %v219
    %v221 = vpop.f32.mrb[0].mxu0
    %222 = vdwg.mxu0
    %223 = vmatprep.subr.mxu0 0.0
    %v224 = vand.u32 %v59, 4294901760
    %v225 = vsub.f32 %v59, %v224
    %226 = vmatpush1.msra.mxu0 %v225
    %227 = vmatprep.subr.mxu0 0.0
    %228 = vmatpush1.msra.mxu0 0.0
    %229 = vmatprep.subr.mxu0 0.0
    %230 = vmatpush1.msra.mxu0 0.0
    %231 = vmatprep.subr.mxu0 0.0
    %232 = vmatpush1.msra.mxu0 0.0
    %233 = vmatprep.subr.mxu0 0.0
    %234 = vmatpush1.msra.mxu0 0.0
    %235 = vmatprep.subr.mxu0 0.0
    %236 = vmatpush1.msra.mxu0 0.0
    %237 = vmatprep.subr.mxu0 0.0
    %238 = vmatpush1.msra.mxu0 0.0
    %239 = vmatprep.subr.mxu0 0.0
    %240 = vmatpush1.msra.mxu0 0.0
    %241 = vmatprep.subr.mxu0 0.0
    %242 = vmatpush1.msra.mxu0 0.0
    %243 = vmatprep.subr.mxu0 0.0
    %244 = vmatpush1.msra.mxu0 0.0
    %245 = vmatprep.subr.mxu0 0.0
    %246 = vmatpush1.msra.mxu0 0.0
    %247 = vmatprep.subr.mxu0 0.0
    %248 = vmatpush1.msra.mxu0 0.0
    %249 = vmatprep.subr.mxu0 0.0
    %250 = vmatpush1.msra.mxu0 0.0
    %251 = vmatprep.subr.mxu0 0.0
    %252 = vmatpush1.msra.mxu0 0.0
    %253 = vmatprep.subr.mxu0 0.0
    %254 = vmatpush1.msra.mxu0 0.0
    %255 = vmatprep.subr.mxu0 0.0
    %256 = vmatpush1.msra.mxu0 0.0
    %257 = vmatprep.subr.mxu0 0.0
    %258 = vmatpush1.msra.mxu0 0.0
    %259 = vmatprep.subr.mxu0 0.0
    %260 = vmatpush1.msra.mxu0 0.0
    %261 = vmatprep.subr.mxu0 0.0
    %262 = vmatpush1.msra.mxu0 0.0
    %263 = vmatprep.subr.mxu0 0.0
    %264 = vmatpush1.msra.mxu0 0.0
    %265 = vmatprep.subr.mxu0 0.0
    %266 = vmatpush1.msra.mxu0 0.0
    %267 = vmatprep.subr.mxu0 0.0
    %268 = vmatpush1.msra.mxu0 0.0
    %269 = vmatprep.subr.mxu0 0.0
    %270 = vmatpush1.msra.mxu0 0.0
    %271 = vmatprep.subr.mxu0 0.0
    %272 = vmatpush1.msra.mxu0 0.0
    %273 = vmatprep.subr.mxu0 0.0
    %274 = vmatpush1.msra.mxu0 0.0
    %275 = vmatprep.subr.mxu0 0.0
    %276 = vmatpush1.msra.mxu0 0.0
    %277 = vmatprep.subr.mxu0 0.0
    %278 = vmatpush1.msra.mxu0 0.0
    %279 = vmatprep.subr.mxu0 0.0
    %280 = vmatpush1.msra.mxu0 0.0
    %281 = vmatprep.subr.mxu0 0.0
    %282 = vmatpush1.msra.mxu0 0.0
    %283 = vmatprep.subr.mxu0 0.0
    %284 = vmatpush1.msra.mxu0 0.0
    %285 = vmatprep.subr.mxu0 0.0
    %286 = vmatpush1.msra.mxu0 0.0
    %287 = vmatprep.subr.mxu0 0.0
    %288 = vmatpush1.msra.mxu0 0.0
    %289 = vmatprep.mubr.f32.mxu0 0.0
    %v290 = vand.u32 %v69, 4294901760
    %v291 = vsub.f32 %v69, %v290
    %292 = vmatmul.mubr.f32.gmra.mrb[0].mxu0 %v291
    %v293 = vpop.f32.mrb[0].mxu0
    %v294 = vadd.f32 %v220, %v293
    %v295 = vpop.f32.mrb[0].mxu0
    %296 = vdwg.mxu0
    %297 = vmatprep.subr.mxu0 0.0
    %v298 = vand.u32 %v59, 4294901760
    %299 = vmatpush1.msra.mxu0 %v298
    %300 = vmatprep.subr.mxu0 0.0
    %301 = vmatpush1.msra.mxu0 0.0
    %302 = vmatprep.subr.mxu0 0.0
    %303 = vmatpush1.msra.mxu0 0.0
    %304 = vmatprep.subr.mxu0 0.0
    %305 = vmatpush1.msra.mxu0 0.0
    %306 = vmatprep.subr.mxu0 0.0
    %307 = vmatpush1.msra.mxu0 0.0
    %308 = vmatprep.subr.mxu0 0.0
    %309 = vmatpush1.msra.mxu0 0.0
    %310 = vmatprep.subr.mxu0 0.0
    %311 = vmatpush1.msra.mxu0 0.0
    %312 = vmatprep.subr.mxu0 0.0
    %313 = vmatpush1.msra.mxu0 0.0
    %314 = vmatprep.subr.mxu0 0.0
    %315 = vmatpush1.msra.mxu0 0.0
    %316 = vmatprep.subr.mxu0 0.0
    %317 = vmatpush1.msra.mxu0 0.0
    %318 = vmatprep.subr.mxu0 0.0
    %319 = vmatpush1.msra.mxu0 0.0
    %320 = vmatprep.subr.mxu0 0.0
    %321 = vmatpush1.msra.mxu0 0.0
    %322 = vmatprep.subr.mxu0 0.0
    %323 = vmatpush1.msra.mxu0 0.0
    %324 = vmatprep.subr.mxu0 0.0
    %325 = vmatpush1.msra.mxu0 0.0
    %326 = vmatprep.subr.mxu0 0.0
    %327 = vmatpush1.msra.mxu0 0.0
    %328 = vmatprep.subr.mxu0 0.0
    %329 = vmatpush1.msra.mxu0 0.0
    %330 = vmatprep.subr.mxu0 0.0
    %331 = vmatpush1.msra.mxu0 0.0
    %332 = vmatprep.subr.mxu0 0.0
    %333 = vmatpush1.msra.mxu0 0.0
    %334 = vmatprep.subr.mxu0 0.0
    %335 = vmatpush1.msra.mxu0 0.0
    %336 = vmatprep.subr.mxu0 0.0
    %337 = vmatpush1.msra.mxu0 0.0
    %338 = vmatprep.subr.mxu0 0.0
    %339 = vmatpush1.msra.mxu0 0.0
    %340 = vmatprep.subr.mxu0 0.0
    %341 = vmatpush1.msra.mxu0 0.0
    %342 = vmatprep.subr.mxu0 0.0
    %343 = vmatpush1.msra.mxu0 0.0
    %344 = vmatprep.subr.mxu0 0.0
    %345 = vmatpush1.msra.mxu0 0.0
    %346 = vmatprep.subr.mxu0 0.0
    %347 = vmatpush1.msra.mxu0 0.0
    %348 = vmatprep.subr.mxu0 0.0
    %349 = vmatpush1.msra.mxu0 0.0
    %350 = vmatprep.subr.mxu0 0.0
    %351 = vmatpush1.msra.mxu0 0.0
    %352 = vmatprep.subr.mxu0 0.0
    %353 = vmatpush1.msra.mxu0 0.0
    %354 = vmatprep.subr.mxu0 0.0
    %355 = vmatpush1.msra.mxu0 0.0
    %356 = vmatprep.subr.mxu0 0.0
    %357 = vmatpush1.msra.mxu0 0.0
    %358 = vmatprep.subr.mxu0 0.0
    %359 = vmatpush1.msra.mxu0 0.0
    %360 = vmatprep.subr.mxu0 0.0
    %361 = vmatpush1.msra.mxu0 0.0
    %362 = vmatprep.mubr.f32.mxu0 0.0
    %v363 = vand.u32 %v69, 4294901760
    %v364 = vsub.f32 %v69, %v363
    %v365 = vand.u32 %v364, 4294901760
    %366 = vmatmul.mubr.f32.gmra.mrb[0].mxu0 %v365
    %v367 = vpop.f32.mrb[0].mxu0
    %v368 = vadd.f32 %v294, %v367
    %v369 = vpop.f32.mrb[0].mxu0
    %370 = vdwg.mxu0
    %371 = vmatprep.subr.mxu0 0.0
    %v372 = vand.u32 %v59, 4294901760
    %v373 = vsub.f32 %v59, %v372
    %v374 = vand.u32 %v373, 4294901760
    %375 = vmatpush1.msra.mxu0 %v374
    %376 = vmatprep.subr.mxu0 0.0
    %377 = vmatpush1.msra.mxu0 0.0
    %378 = vmatprep.subr.mxu0 0.0
    %379 = vmatpush1.msra.mxu0 0.0
    %380 = vmatprep.subr.mxu0 0.0
    %381 = vmatpush1.msra.mxu0 0.0
    %382 = vmatprep.subr.mxu0 0.0
    %383 = vmatpush1.msra.mxu0 0.0
    %384 = vmatprep.subr.mxu0 0.0
    %385 = vmatpush1.msra.mxu0 0.0
    %386 = vmatprep.subr.mxu0 0.0
    %387 = vmatpush1.msra.mxu0 0.0
    %388 = vmatprep.subr.mxu0 0.0
    %389 = vmatpush1.msra.mxu0 0.0
    %390 = vmatprep.subr.mxu0 0.0
    %391 = vmatpush1.msra.mxu0 0.0
    %392 = vmatprep.subr.mxu0 0.0
    %393 = vmatpush1.msra.mxu0 0.0
    %394 = vmatprep.subr.mxu0 0.0
    %395 = vmatpush1.msra.mxu0 0.0
    %396 = vmatprep.subr.mxu0 0.0
    %397 = vmatpush1.msra.mxu0 0.0
    %398 = vmatprep.subr.mxu0 0.0
    %399 = vmatpush1.msra.mxu0 0.0
    %400 = vmatprep.subr.mxu0 0.0
    %401 = vmatpush1.msra.mxu0 0.0
    %402 = vmatprep.subr.mxu0 0.0
    %403 = vmatpush1.msra.mxu0 0.0
    %404 = vmatprep.subr.mxu0 0.0
    %405 = vmatpush1.msra.mxu0 0.0
    %406 = vmatprep.subr.mxu0 0.0
    %407 = vmatpush1.msra.mxu0 0.0
    %408 = vmatprep.subr.mxu0 0.0
    %409 = vmatpush1.msra.mxu0 0.0
    %410 = vmatprep.subr.mxu0 0.0
    %411 = vmatpush1.msra.mxu0 0.0
    %412 = vmatprep.subr.mxu0 0.0
    %413 = vmatpush1.msra.mxu0 0.0
    %414 = vmatprep.subr.mxu0 0.0
    %415 = vmatpush1.msra.mxu0 0.0
    %416 = vmatprep.subr.mxu0 0.0
    %417 = vmatpush1.msra.mxu0 0.0
    %418 = vmatprep.subr.mxu0 0.0
    %419 = vmatpush1.msra.mxu0 0.0
    %420 = vmatprep.subr.mxu0 0.0
    %421 = vmatpush1.msra.mxu0 0.0
    %422 = vmatprep.subr.mxu0 0.0
    %423 = vmatpush1.msra.mxu0 0.0
    %424 = vmatprep.subr.mxu0 0.0
    %425 = vmatpush1.msra.mxu0 0.0
    %426 = vmatprep.subr.mxu0 0.0
    %427 = vmatpush1.msra.mxu0 0.0
    %428 = vmatprep.subr.mxu0 0.0
    %429 = vmatpush1.msra.mxu0 0.0
    %430 = vmatprep.subr.mxu0 0.0
    %431 = vmatpush1.msra.mxu0 0.0
    %432 = vmatprep.subr.mxu0 0.0
    %433 = vmatpush1.msra.mxu0 0.0
    %434 = vmatprep.subr.mxu0 0.0
    %435 = vmatpush1.msra.mxu0 0.0
    %436 = vmatprep.subr.mxu0 0.0
    %437 = vmatpush1.msra.mxu0 0.0
    %438 = vmatprep.mubr.f32.mxu0 0.0
    %v439 = vand.u32 %v69, 4294901760
    %440 = vmatmul.mubr.f32.gmra.mrb[0].mxu0 %v439
    %v441 = vpop.f32.mrb[0].mxu0
    %v442 = vadd.f32 %v368, %v441
    %v443 = vpop.f32.mrb[0].mxu0
    %444 = vdwg.mxu0
    %445 = vmatprep.subr.mxu0 0.0
    %v446 = vand.u32 %v59, 4294901760
    %447 = vmatpush1.msra.mxu0 %v446
    %448 = vmatprep.subr.mxu0 0.0
    %449 = vmatpush1.msra.mxu0 0.0
    %450 = vmatprep.subr.mxu0 0.0
    %451 = vmatpush1.msra.mxu0 0.0
    %452 = vmatprep.subr.mxu0 0.0
    %453 = vmatpush1.msra.mxu0 0.0
    %454 = vmatprep.subr.mxu0 0.0
    %455 = vmatpush1.msra.mxu0 0.0
    %456 = vmatprep.subr.mxu0 0.0
    %457 = vmatpush1.msra.mxu0 0.0
    %458 = vmatprep.subr.mxu0 0.0
    %459 = vmatpush1.msra.mxu0 0.0
    %460 = vmatprep.subr.mxu0 0.0
    %461 = vmatpush1.msra.mxu0 0.0
    %462 = vmatprep.subr.mxu0 0.0
    %463 = vmatpush1.msra.mxu0 0.0
    %464 = vmatprep.subr.mxu0 0.0
    %465 = vmatpush1.msra.mxu0 0.0
    %466 = vmatprep.subr.mxu0 0.0
    %467 = vmatpush1.msra.mxu0 0.0
    %468 = vmatprep.subr.mxu0 0.0
    %469 = vmatpush1.msra.mxu0 0.0
    %470 = vmatprep.subr.mxu0 0.0
    %471 = vmatpush1.msra.mxu0 0.0
    %472 = vmatprep.subr.mxu0 0.0
    %473 = vmatpush1.msra.mxu0 0.0
    %474 = vmatprep.subr.mxu0 0.0
    %475 = vmatpush1.msra.mxu0 0.0
    %476 = vmatprep.subr.mxu0 0.0
    %477 = vmatpush1.msra.mxu0 0.0
    %478 = vmatprep.subr.mxu0 0.0
    %479 = vmatpush1.msra.mxu0 0.0
    %480 = vmatprep.subr.mxu0 0.0
    %481 = vmatpush1.msra.mxu0 0.0
    %482 = vmatprep.subr.mxu0 0.0
    %483 = vmatpush1.msra.mxu0 0.0
    %484 = vmatprep.subr.mxu0 0.0
    %485 = vmatpush1.msra.mxu0 0.0
    %486 = vmatprep.subr.mxu0 0.0
    %487 = vmatpush1.msra.mxu0 0.0
    %488 = vmatprep.subr.mxu0 0.0
    %489 = vmatpush1.msra.mxu0 0.0
    %490 = vmatprep.subr.mxu0 0.0
    %491 = vmatpush1.msra.mxu0 0.0
    %492 = vmatprep.subr.mxu0 0.0
    %493 = vmatpush1.msra.mxu0 0.0
    %494 = vmatprep.subr.mxu0 0.0
    %495 = vmatpush1.msra.mxu0 0.0
    %496 = vmatprep.subr.mxu0 0.0
    %497 = vmatpush1.msra.mxu0 0.0
    %498 = vmatprep.subr.mxu0 0.0
    %499 = vmatpush1.msra.mxu0 0.0
    %500 = vmatprep.subr.mxu0 0.0
    %501 = vmatpush1.msra.mxu0 0.0
    %502 = vmatprep.subr.mxu0 0.0
    %503 = vmatpush1.msra.mxu0 0.0
    %504 = vmatprep.subr.mxu0 0.0
    %505 = vmatpush1.msra.mxu0 0.0
    %506 = vmatprep.subr.mxu0 0.0
    %507 = vmatpush1.msra.mxu0 0.0
    %508 = vmatprep.subr.mxu0 0.0
    %509 = vmatpush1.msra.mxu0 0.0
    %510 = vmatprep.mubr.f32.mxu0 0.0
    %v511 = vand.u32 %v69, 4294901760
    %512 = vmatmul.mubr.f32.gmra.mrb[0].mxu0 %v511
    %v513 = vpop.f32.mrb[0].mxu0
    %v514 = vadd.f32 %v442, %v513
    %v515 = vpop.f32.mrb[0].mxu0
    %516 = vdwg.mxu0
    %v517 = vmax.f32 %v514, 0.0
    %v518 = vld [vmem:[#allocation7] sm:$0xff]
    %v519 = vld [vmem:[#allocation7 + $0x8] sm:$0xff]
    %v520 = vld [vmem:[#allocation7 + $0x10] sm:$0xff]
    %v521 = vld [vmem:[#allocation7 + $0x18] sm:$0xff]
    %v522 = vld [vmem:[#allocation7 + $0x20] sm:$0xff]
    %v523 = vld [vmem:[#allocation7 + $0x28] sm:$0xff]
    %v524 = vld [vmem:[#allocation7 + $0x30] sm:$0xff]
    %v525 = vld [vmem:[#allocation7 + $0x38] sm:$0xff]
    %v526 = vld [vmem:[#allocation7 + $0x40] sm:$0xff]
    %v527 = vld [vmem:[#allocation7 + $0x48] sm:$0xff]
    %v528 = vld [vmem:[#allocation7 + $0x50] sm:$0xff]
    %v529 = vld [vmem:[#allocation7 + $0x58] sm:$0xff]
    %v530 = vld [vmem:[#allocation7 + $0x60] sm:$0xff]
    %v531 = vld [vmem:[#allocation7 + $0x68] sm:$0xff]
    %v532 = vld [vmem:[#allocation7 + $0x70] sm:$0xff]
    %v533 = vld [vmem:[#allocation7 + $0x78] sm:$0xff]
    %v534 = vld [vmem:[%s4] sm:$0x1]
    %v536 = vlaneseq
    %v537 = vshrl.u32 %v536, 7
    %v538 = vsub.s32 0, %v537
    %v539 = vrot.slane %v534, %v538
    %541 = vmatprep.subr.mxu0 0.0
    %v542 = vand.u32 %v518, 4294901760
    %543 = vmatpush1.msra.mxu0 %v542
    %544 = vmatprep.subr.mxu0 0.0
    %v545 = vand.u32 %v519, 4294901760
    %546 = vmatpush1.msra.mxu0 %v545
    %547 = vmatprep.subr.mxu0 0.0
    %v548 = vand.u32 %v520, 4294901760
    %549 = vmatpush1.msra.mxu0 %v548
    %550 = vmatprep.subr.mxu0 0.0
    %v551 = vand.u32 %v521, 4294901760
    %552 = vmatpush1.msra.mxu0 %v551
    %553 = vmatprep.subr.mxu0 0.0
    %v554 = vand.u32 %v522, 4294901760
    %555 = vmatpush1.msra.mxu0 %v554
    %556 = vmatprep.subr.mxu0 0.0
    %v557 = vand.u32 %v523, 4294901760
    %558 = vmatpush1.msra.mxu0 %v557
    %559 = vmatprep.subr.mxu0 0.0
    %v560 = vand.u32 %v524, 4294901760
    %561 = vmatpush1.msra.mxu0 %v560
    %562 = vmatprep.subr.mxu0 0.0
    %v563 = vand.u32 %v525, 4294901760
    %564 = vmatpush1.msra.mxu0 %v563
    %565 = vmatprep.subr.mxu0 0.0
    %v566 = vand.u32 %v526, 4294901760
    %567 = vmatpush1.msra.mxu0 %v566
    %568 = vmatprep.subr.mxu0 0.0
    %v569 = vand.u32 %v527, 4294901760
    %570 = vmatpush1.msra.mxu0 %v569
    %571 = vmatprep.subr.mxu0 0.0
    %v572 = vand.u32 %v528, 4294901760
    %573 = vmatpush1.msra.mxu0 %v572
    %574 = vmatprep.subr.mxu0 0.0
    %v575 = vand.u32 %v529, 4294901760
    %576 = vmatpush1.msra.mxu0 %v575
    %577 = vmatprep.subr.mxu0 0.0
    %v578 = vand.u32 %v530, 4294901760
    %579 = vmatpush1.msra.mxu0 %v578
    %580 = vmatprep.subr.mxu0 0.0
    %v581 = vand.u32 %v531, 4294901760
    %582 = vmatpush1.msra.mxu0 %v581
    %583 = vmatprep.subr.mxu0 0.0
    %v584 = vand.u32 %v532, 4294901760
    %585 = vmatpush1.msra.mxu0 %v584
    %586 = vmatprep.subr.mxu0 0.0
    %v587 = vand.u32 %v533, 4294901760
    %588 = vmatpush1.msra.mxu0 %v587
    %589 = vmatprep.subr.mxu0 0.0
    %590 = vmatpush1.msra.mxu0 0.0
    %591 = vmatprep.subr.mxu0 0.0
    %592 = vmatpush1.msra.mxu0 0.0
    %593 = vmatprep.subr.mxu0 0.0
    %594 = vmatpush1.msra.mxu0 0.0
    %595 = vmatprep.subr.mxu0 0.0
    %596 = vmatpush1.msra.mxu0 0.0
    %597 = vmatprep.subr.mxu0 0.0
    %598 = vmatpush1.msra.mxu0 0.0
    %599 = vmatprep.subr.mxu0 0.0
    %600 = vmatpush1.msra.mxu0 0.0
    %601 = vmatprep.subr.mxu0 0.0
    %602 = vmatpush1.msra.mxu0 0.0
    %603 = vmatprep.subr.mxu0 0.0
    %604 = vmatpush1.msra.mxu0 0.0
    %605 = vmatprep.subr.mxu0 0.0
    %606 = vmatpush1.msra.mxu0 0.0
    %607 = vmatprep.subr.mxu0 0.0
    %608 = vmatpush1.msra.mxu0 0.0
    %609 = vmatprep.subr.mxu0 0.0
    %610 = vmatpush1.msra.mxu0 0.0
    %611 = vmatprep.subr.mxu0 0.0
    %612 = vmatpush1.msra.mxu0 0.0
    %613 = vmatprep.subr.mxu0 0.0
    %614 = vmatpush1.msra.mxu0 0.0
    %615 = vmatprep.subr.mxu0 0.0
    %616 = vmatpush1.msra.mxu0 0.0
    %617 = vmatprep.subr.mxu0 0.0
    %618 = vmatpush1.msra.mxu0 0.0
    %619 = vmatprep.subr.mxu0 0.0
    %620 = vmatpush1.msra.mxu0 0.0
    %621 = vmatprep.mubr.f32.mxu0 0.0
    %v622 = vand.u32 %v517, 4294901760
    %v623 = vsub.f32 %v517, %v622
    %v624 = vand.u32 %v623, 4294901760
    %v625 = vsub.f32 %v623, %v624
    %v626 = vand.u32 %v625, 4294901760
    %627 = vmatmul.mubr.f32.gmra.mrb[0].mxu0 %v626
    %v628 = vpop.f32.mrb[0].mxu0
    %v629 = vadd.f32 %v539, %v628
    %v630 = vpop.f32.mrb[0].mxu0
    %631 = vdwg.mxu0
    %632 = vmatprep.subr.mxu0 0.0
    %v633 = vand.u32 %v518, 4294901760
    %v634 = vsub.f32 %v518, %v633
    %v635 = vand.u32 %v634, 4294901760
    %v636 = vsub.f32 %v634, %v635
    %v637 = vand.u32 %v636, 4294901760
    %638 = vmatpush1.msra.mxu0 %v637
    %639 = vmatprep.subr.mxu0 0.0
    %v640 = vand.u32 %v519, 4294901760
    %v641 = vsub.f32 %v519, %v640
    %v642 = vand.u32 %v641, 4294901760
    %v643 = vsub.f32 %v641, %v642
    %v644 = vand.u32 %v643, 4294901760
    %645 = vmatpush1.msra.mxu0 %v644
    %646 = vmatprep.subr.mxu0 0.0
    %v647 = vand.u32 %v520, 4294901760
    %v648 = vsub.f32 %v520, %v647
    %v649 = vand.u32 %v648, 4294901760
    %v650 = vsub.f32 %v648, %v649
    %v651 = vand.u32 %v650, 4294901760
    %652 = vmatpush1.msra.mxu0 %v651
    %653 = vmatprep.subr.mxu0 0.0
    %v654 = vand.u32 %v521, 4294901760
    %v655 = vsub.f32 %v521, %v654
    %v656 = vand.u32 %v655, 4294901760
    %v657 = vsub.f32 %v655, %v656
    %v658 = vand.u32 %v657, 4294901760
    %659 = vmatpush1.msra.mxu0 %v658
    %660 = vmatprep.subr.mxu0 0.0
    %v661 = vand.u32 %v522, 4294901760
    %v662 = vsub.f32 %v522, %v661
    %v663 = vand.u32 %v662, 4294901760
    %v664 = vsub.f32 %v662, %v663
    %v665 = vand.u32 %v664, 4294901760
    %666 = vmatpush1.msra.mxu0 %v665
    %667 = vmatprep.subr.mxu0 0.0
    %v668 = vand.u32 %v523, 4294901760
    %v669 = vsub.f32 %v523, %v668
    %v670 = vand.u32 %v669, 4294901760
    %v671 = vsub.f32 %v669, %v670
    %v672 = vand.u32 %v671, 4294901760
    %673 = vmatpush1.msra.mxu0 %v672
    %674 = vmatprep.subr.mxu0 0.0
    %v675 = vand.u32 %v524, 4294901760
    %v676 = vsub.f32 %v524, %v675
    %v677 = vand.u32 %v676, 4294901760
    %v678 = vsub.f32 %v676, %v677
    %v679 = vand.u32 %v678, 4294901760
    %680 = vmatpush1.msra.mxu0 %v679
    %681 = vmatprep.subr.mxu0 0.0
    %v682 = vand.u32 %v525, 4294901760
    %v683 = vsub.f32 %v525, %v682
    %v684 = vand.u32 %v683, 4294901760
    %v685 = vsub.f32 %v683, %v684
    %v686 = vand.u32 %v685, 4294901760
    %687 = vmatpush1.msra.mxu0 %v686
    %688 = vmatprep.subr.mxu0 0.0
    %v689 = vand.u32 %v526, 4294901760
    %v690 = vsub.f32 %v526, %v689
    %v691 = vand.u32 %v690, 4294901760
    %v692 = vsub.f32 %v690, %v691
    %v693 = vand.u32 %v692, 4294901760
    %694 = vmatpush1.msra.mxu0 %v693
    %695 = vmatprep.subr.mxu0 0.0
    %v696 = vand.u32 %v527, 4294901760
    %v697 = vsub.f32 %v527, %v696
    %v698 = vand.u32 %v697, 4294901760
    %v699 = vsub.f32 %v697, %v698
    %v700 = vand.u32 %v699, 4294901760
    %701 = vmatpush1.msra.mxu0 %v700
    %702 = vmatprep.subr.mxu0 0.0
    %v703 = vand.u32 %v528, 4294901760
    %v704 = vsub.f32 %v528, %v703
    %v705 = vand.u32 %v704, 4294901760
    %v706 = vsub.f32 %v704, %v705
    %v707 = vand.u32 %v706, 4294901760
    %708 = vmatpush1.msra.mxu0 %v707
    %709 = vmatprep.subr.mxu0 0.0
    %v710 = vand.u32 %v529, 4294901760
    %v711 = vsub.f32 %v529, %v710
    %v712 = vand.u32 %v711, 4294901760
    %v713 = vsub.f32 %v711, %v712
    %v714 = vand.u32 %v713, 4294901760
    %715 = vmatpush1.msra.mxu0 %v714
    %716 = vmatprep.subr.mxu0 0.0
    %v717 = vand.u32 %v530, 4294901760
    %v718 = vsub.f32 %v530, %v717
    %v719 = vand.u32 %v718, 4294901760
    %v720 = vsub.f32 %v718, %v719
    %v721 = vand.u32 %v720, 4294901760
    %722 = vmatpush1.msra.mxu0 %v721
    %723 = vmatprep.subr.mxu0 0.0
    %v724 = vand.u32 %v531, 4294901760
    %v725 = vsub.f32 %v531, %v724
    %v726 = vand.u32 %v725, 4294901760
    %v727 = vsub.f32 %v725, %v726
    %v728 = vand.u32 %v727, 4294901760
    %729 = vmatpush1.msra.mxu0 %v728
    %730 = vmatprep.subr.mxu0 0.0
    %v731 = vand.u32 %v532, 4294901760
    %v732 = vsub.f32 %v532, %v731
    %v733 = vand.u32 %v732, 4294901760
    %v734 = vsub.f32 %v732, %v733
    %v735 = vand.u32 %v734, 4294901760
    %736 = vmatpush1.msra.mxu0 %v735
    %737 = vmatprep.subr.mxu0 0.0
    %v738 = vand.u32 %v533, 4294901760
    %v739 = vsub.f32 %v533, %v738
    %v740 = vand.u32 %v739, 4294901760
    %v741 = vsub.f32 %v739, %v740
    %v742 = vand.u32 %v741, 4294901760
    %743 = vmatpush1.msra.mxu0 %v742
    %744 = vmatprep.subr.mxu0 0.0
    %745 = vmatpush1.msra.mxu0 0.0
    %746 = vmatprep.subr.mxu0 0.0
    %747 = vmatpush1.msra.mxu0 0.0
    %748 = vmatprep.subr.mxu0 0.0
    %749 = vmatpush1.msra.mxu0 0.0
    %750 = vmatprep.subr.mxu0 0.0
    %751 = vmatpush1.msra.mxu0 0.0
    %752 = vmatprep.subr.mxu0 0.0
    %753 = vmatpush1.msra.mxu0 0.0
    %754 = vmatprep.subr.mxu0 0.0
    %755 = vmatpush1.msra.mxu0 0.0
    %756 = vmatprep.subr.mxu0 0.0
    %757 = vmatpush1.msra.mxu0 0.0
    %758 = vmatprep.subr.mxu0 0.0
    %759 = vmatpush1.msra.mxu0 0.0
    %760 = vmatprep.subr.mxu0 0.0
    %761 = vmatpush1.msra.mxu0 0.0
    %762 = vmatprep.subr.mxu0 0.0
    %763 = vmatpush1.msra.mxu0 0.0
    %764 = vmatprep.subr.mxu0 0.0
    %765 = vmatpush1.msra.mxu0 0.0
    %766 = vmatprep.subr.mxu0 0.0
    %767 = vmatpush1.msra.mxu0 0.0
    %768 = vmatprep.subr.mxu0 0.0
    %769 = vmatpush1.msra.mxu0 0.0
    %770 = vmatprep.subr.mxu0 0.0
    %771 = vmatpush1.msra.mxu0 0.0
    %772 = vmatprep.subr.mxu0 0.0
    %773 = vmatpush1.msra.mxu0 0.0
    %774 = vmatprep.subr.mxu0 0.0
    %775 = vmatpush1.msra.mxu0 0.0
    %776 = vmatprep.mubr.f32.mxu0 0.0
    %v777 = vand.u32 %v517, 4294901760
    %778 = vmatmul.mubr.f32.gmra.mrb[0].mxu0 %v777
    %v779 = vpop.f32.mrb[0].mxu0
    %v780 = vadd.f32 %v629, %v779
    %v781 = vpop.f32.mrb[0].mxu0
    %782 = vdwg.mxu0
    %783 = vmatprep.subr.mxu0 0.0
    %v784 = vand.u32 %v518, 4294901760
    %v785 = vsub.f32 %v518, %v784
    %786 = vmatpush1.msra.mxu0 %v785
    %787 = vmatprep.subr.mxu0 0.0
    %v788 = vand.u32 %v519, 4294901760
    %v789 = vsub.f32 %v519, %v788
    %790 = vmatpush1.msra.mxu0 %v789
    %791 = vmatprep.subr.mxu0 0.0
    %v792 = vand.u32 %v520, 4294901760
    %v793 = vsub.f32 %v520, %v792
    %794 = vmatpush1.msra.mxu0 %v793
    %795 = vmatprep.subr.mxu0 0.0
    %v796 = vand.u32 %v521, 4294901760
    %v797 = vsub.f32 %v521, %v796
    %798 = vmatpush1.msra.mxu0 %v797
    %799 = vmatprep.subr.mxu0 0.0
    %v800 = vand.u32 %v522, 4294901760
    %v801 = vsub.f32 %v522, %v800
    %802 = vmatpush1.msra.mxu0 %v801
    %803 = vmatprep.subr.mxu0 0.0
    %v804 = vand.u32 %v523, 4294901760
    %v805 = vsub.f32 %v523, %v804
    %806 = vmatpush1.msra.mxu0 %v805
    %807 = vmatprep.subr.mxu0 0.0
    %v808 = vand.u32 %v524, 4294901760
    %v809 = vsub.f32 %v524, %v808
    %810 = vmatpush1.msra.mxu0 %v809
    %811 = vmatprep.subr.mxu0 0.0
    %v812 = vand.u32 %v525, 4294901760
    %v813 = vsub.f32 %v525, %v812
    %814 = vmatpush1.msra.mxu0 %v813
    %815 = vmatprep.subr.mxu0 0.0
    %v816 = vand.u32 %v526, 4294901760
    %v817 = vsub.f32 %v526, %v816
    %818 = vmatpush1.msra.mxu0 %v817
    %819 = vmatprep.subr.mxu0 0.0
    %v820 = vand.u32 %v527, 4294901760
    %v821 = vsub.f32 %v527, %v820
    %822 = vmatpush1.msra.mxu0 %v821
    %823 = vmatprep.subr.mxu0 0.0
    %v824 = vand.u32 %v528, 4294901760
    %v825 = vsub.f32 %v528, %v824
    %826 = vmatpush1.msra.mxu0 %v825
    %827 = vmatprep.subr.mxu0 0.0
    %v828 = vand.u32 %v529, 4294901760
    %v829 = vsub.f32 %v529, %v828
    %830 = vmatpush1.msra.mxu0 %v829
    %831 = vmatprep.subr.mxu0 0.0
    %v832 = vand.u32 %v530, 4294901760
    %v833 = vsub.f32 %v530, %v832
    %834 = vmatpush1.msra.mxu0 %v833
    %835 = vmatprep.subr.mxu0 0.0
    %v836 = vand.u32 %v531, 4294901760
    %v837 = vsub.f32 %v531, %v836
    %838 = vmatpush1.msra.mxu0 %v837
    %839 = vmatprep.subr.mxu0 0.0
    %v840 = vand.u32 %v532, 4294901760
    %v841 = vsub.f32 %v532, %v840
    %842 = vmatpush1.msra.mxu0 %v841
    %843 = vmatprep.subr.mxu0 0.0
    %v844 = vand.u32 %v533, 4294901760
    %v845 = vsub.f32 %v533, %v844
    %846 = vmatpush1.msra.mxu0 %v845
    %847 = vmatprep.subr.mxu0 0.0
    %848 = vmatpush1.msra.mxu0 0.0
    %849 = vmatprep.subr.mxu0 0.0
    %850 = vmatpush1.msra.mxu0 0.0
    %851 = vmatprep.subr.mxu0 0.0
    %852 = vmatpush1.msra.mxu0 0.0
    %853 = vmatprep.subr.mxu0 0.0
    %854 = vmatpush1.msra.mxu0 0.0
    %855 = vmatprep.subr.mxu0 0.0
    %856 = vmatpush1.msra.mxu0 0.0
    %857 = vmatprep.subr.mxu0 0.0
    %858 = vmatpush1.msra.mxu0 0.0
    %859 = vmatprep.subr.mxu0 0.0
    %860 = vmatpush1.msra.mxu0 0.0
    %861 = vmatprep.subr.mxu0 0.0
    %862 = vmatpush1.msra.mxu0 0.0
    %863 = vmatprep.subr.mxu0 0.0
    %864 = vmatpush1.msra.mxu0 0.0
    %865 = vmatprep.subr.mxu0 0.0
    %866 = vmatpush1.msra.mxu0 0.0
    %867 = vmatprep.subr.mxu0 0.0
    %868 = vmatpush1.msra.mxu0 0.0
    %869 = vmatprep.subr.mxu0 0.0
    %870 = vmatpush1.msra.mxu0 0.0
    %871 = vmatprep.subr.mxu0 0.0
    %872 = vmatpush1.msra.mxu0 0.0
    %873 = vmatprep.subr.mxu0 0.0
    %874 = vmatpush1.msra.mxu0 0.0
    %875 = vmatprep.subr.mxu0 0.0
    %876 = vmatpush1.msra.mxu0 0.0
    %877 = vmatprep.subr.mxu0 0.0
    %878 = vmatpush1.msra.mxu0 0.0
    %879 = vmatprep.mubr.f32.mxu0 0.0
    %v880 = vand.u32 %v517, 4294901760
    %v881 = vsub.f32 %v517, %v880
    %882 = vmatmul.mubr.f32.gmra.mrb[0].mxu0 %v881
    %v883 = vpop.f32.mrb[0].mxu0
    %v884 = vadd.f32 %v780, %v883
    %v885 = vpop.f32.mrb[0].mxu0
    %886 = vdwg.mxu0
    %887 = vmatprep.subr.mxu0 0.0
    %v888 = vand.u32 %v518, 4294901760
    %889 = vmatpush1.msra.mxu0 %v888
    %890 = vmatprep.subr.mxu0 0.0
    %v891 = vand.u32 %v519, 4294901760
    %892 = vmatpush1.msra.mxu0 %v891
    %893 = vmatprep.subr.mxu0 0.0
    %v894 = vand.u32 %v520, 4294901760
    %895 = vmatpush1.msra.mxu0 %v894
    %896 = vmatprep.subr.mxu0 0.0
    %v897 = vand.u32 %v521, 4294901760
    %898 = vmatpush1.msra.mxu0 %v897
    %899 = vmatprep.subr.mxu0 0.0
    %v900 = vand.u32 %v522, 4294901760
    %901 = vmatpush1.msra.mxu0 %v900
    %902 = vmatprep.subr.mxu0 0.0
    %v903 = vand.u32 %v523, 4294901760
    %904 = vmatpush1.msra.mxu0 %v903
    %905 = vmatprep.subr.mxu0 0.0
    %v906 = vand.u32 %v524, 4294901760
    %907 = vmatpush1.msra.mxu0 %v906
    %908 = vmatprep.subr.mxu0 0.0
    %v909 = vand.u32 %v525, 4294901760
    %910 = vmatpush1.msra.mxu0 %v909
    %911 = vmatprep.subr.mxu0 0.0
    %v912 = vand.u32 %v526, 4294901760
    %913 = vmatpush1.msra.mxu0 %v912
    %914 = vmatprep.subr.mxu0 0.0
    %v915 = vand.u32 %v527, 4294901760
    %916 = vmatpush1.msra.mxu0 %v915
    %917 = vmatprep.subr.mxu0 0.0
    %v918 = vand.u32 %v528, 4294901760
    %919 = vmatpush1.msra.mxu0 %v918
    %920 = vmatprep.subr.mxu0 0.0
    %v921 = vand.u32 %v529, 4294901760
    %922 = vmatpush1.msra.mxu0 %v921
    %923 = vmatprep.subr.mxu0 0.0
    %v924 = vand.u32 %v530, 4294901760
    %925 = vmatpush1.msra.mxu0 %v924
    %926 = vmatprep.subr.mxu0 0.0
    %v927 = vand.u32 %v531, 4294901760
    %928 = vmatpush1.msra.mxu0 %v927
    %929 = vmatprep.subr.mxu0 0.0
    %v930 = vand.u32 %v532, 4294901760
    %931 = vmatpush1.msra.mxu0 %v930
    %932 = vmatprep.subr.mxu0 0.0
    %v933 = vand.u32 %v533, 4294901760
    %934 = vmatpush1.msra.mxu0 %v933
    %935 = vmatprep.subr.mxu0 0.0
    %936 = vmatpush1.msra.mxu0 0.0
    %937 = vmatprep.subr.mxu0 0.0
    %938 = vmatpush1.msra.mxu0 0.0
    %939 = vmatprep.subr.mxu0 0.0
    %940 = vmatpush1.msra.mxu0 0.0
    %941 = vmatprep.subr.mxu0 0.0
    %942 = vmatpush1.msra.mxu0 0.0
    %943 = vmatprep.subr.mxu0 0.0
    %944 = vmatpush1.msra.mxu0 0.0
    %945 = vmatprep.subr.mxu0 0.0
    %946 = vmatpush1.msra.mxu0 0.0
    %947 = vmatprep.subr.mxu0 0.0
    %948 = vmatpush1.msra.mxu0 0.0
    %949 = vmatprep.subr.mxu0 0.0
    %950 = vmatpush1.msra.mxu0 0.0
    %951 = vmatprep.subr.mxu0 0.0
    %952 = vmatpush1.msra.mxu0 0.0
    %953 = vmatprep.subr.mxu0 0.0
    %954 = vmatpush1.msra.mxu0 0.0
    %955 = vmatprep.subr.mxu0 0.0
    %956 = vmatpush1.msra.mxu0 0.0
    %957 = vmatprep.subr.mxu0 0.0
    %958 = vmatpush1.msra.mxu0 0.0
    %959 = vmatprep.subr.mxu0 0.0
    %960 = vmatpush1.msra.mxu0 0.0
    %961 = vmatprep.subr.mxu0 0.0
    %962 = vmatpush1.msra.mxu0 0.0
    %963 = vmatprep.subr.mxu0 0.0
    %964 = vmatpush1.msra.mxu0 0.0
    %965 = vmatprep.subr.mxu0 0.0
    %966 = vmatpush1.msra.mxu0 0.0
    %967 = vmatprep.mubr.f32.mxu0 0.0
    %v968 = vand.u32 %v517, 4294901760
    %v969 = vsub.f32 %v517, %v968
    %v970 = vand.u32 %v969, 4294901760
    %971 = vmatmul.mubr.f32.gmra.mrb[0].mxu0 %v970
    %v972 = vpop.f32.mrb[0].mxu0
    %v973 = vadd.f32 %v884, %v972
    %v974 = vpop.f32.mrb[0].mxu0
    %975 = vdwg.mxu0
    %976 = vmatprep.subr.mxu0 0.0
    %v977 = vand.u32 %v518, 4294901760
    %v978 = vsub.f32 %v518, %v977
    %v979 = vand.u32 %v978, 4294901760
    %980 = vmatpush1.msra.mxu0 %v979
    %981 = vmatprep.subr.mxu0 0.0
    %v982 = vand.u32 %v519, 4294901760
    %v983 = vsub.f32 %v519, %v982
    %v984 = vand.u32 %v983, 4294901760
    %985 = vmatpush1.msra.mxu0 %v984
    %986 = vmatprep.subr.mxu0 0.0
    %v987 = vand.u32 %v520, 4294901760
    %v988 = vsub.f32 %v520, %v987
    %v989 = vand.u32 %v988, 4294901760
    %990 = vmatpush1.msra.mxu0 %v989
    %991 = vmatprep.subr.mxu0 0.0
    %v992 = vand.u32 %v521, 4294901760
    %v993 = vsub.f32 %v521, %v992
    %v994 = vand.u32 %v993, 4294901760
    %995 = vmatpush1.msra.mxu0 %v994
    %996 = vmatprep.subr.mxu0 0.0
    %v997 = vand.u32 %v522, 4294901760
    %v998 = vsub.f32 %v522, %v997
    %v999 = vand.u32 %v998, 4294901760
    %1000 = vmatpush1.msra.mxu0 %v999
    %1001 = vmatprep.subr.mxu0 0.0
    %v1002 = vand.u32 %v523, 4294901760
    %v1003 = vsub.f32 %v523, %v1002
    %v1004 = vand.u32 %v1003, 4294901760
    %1005 = vmatpush1.msra.mxu0 %v1004
    %1006 = vmatprep.subr.mxu0 0.0
    %v1007 = vand.u32 %v524, 4294901760
    %v1008 = vsub.f32 %v524, %v1007
    %v1009 = vand.u32 %v1008, 4294901760
    %1010 = vmatpush1.msra.mxu0 %v1009
    %1011 = vmatprep.subr.mxu0 0.0
    %v1012 = vand.u32 %v525, 4294901760
    %v1013 = vsub.f32 %v525, %v1012
    %v1014 = vand.u32 %v1013, 4294901760
    %1015 = vmatpush1.msra.mxu0 %v1014
    %1016 = vmatprep.subr.mxu0 0.0
    %v1017 = vand.u32 %v526, 4294901760
    %v1018 = vsub.f32 %v526, %v1017
    %v1019 = vand.u32 %v1018, 4294901760
    %1020 = vmatpush1.msra.mxu0 %v1019
    %1021 = vmatprep.subr.mxu0 0.0
    %v1022 = vand.u32 %v527, 4294901760
    %v1023 = vsub.f32 %v527, %v1022
    %v1024 = vand.u32 %v1023, 4294901760
    %1025 = vmatpush1.msra.mxu0 %v1024
    %1026 = vmatprep.subr.mxu0 0.0
    %v1027 = vand.u32 %v528, 4294901760
    %v1028 = vsub.f32 %v528, %v1027
    %v1029 = vand.u32 %v1028, 4294901760
    %1030 = vmatpush1.msra.mxu0 %v1029
    %1031 = vmatprep.subr.mxu0 0.0
    %v1032 = vand.u32 %v529, 4294901760
    %v1033 = vsub.f32 %v529, %v1032
    %v1034 = vand.u32 %v1033, 4294901760
    %1035 = vmatpush1.msra.mxu0 %v1034
    %1036 = vmatprep.subr.mxu0 0.0
    %v1037 = vand.u32 %v530, 4294901760
    %v1038 = vsub.f32 %v530, %v1037
    %v1039 = vand.u32 %v1038, 4294901760
    %1040 = vmatpush1.msra.mxu0 %v1039
    %1041 = vmatprep.subr.mxu0 0.0
    %v1042 = vand.u32 %v531, 4294901760
    %v1043 = vsub.f32 %v531, %v1042
    %v1044 = vand.u32 %v1043, 4294901760
    %1045 = vmatpush1.msra.mxu0 %v1044
    %1046 = vmatprep.subr.mxu0 0.0
    %v1047 = vand.u32 %v532, 4294901760
    %v1048 = vsub.f32 %v532, %v1047
    %v1049 = vand.u32 %v1048, 4294901760
    %1050 = vmatpush1.msra.mxu0 %v1049
    %1051 = vmatprep.subr.mxu0 0.0
    %v1052 = vand.u32 %v533, 4294901760
    %v1053 = vsub.f32 %v533, %v1052
    %v1054 = vand.u32 %v1053, 4294901760
    %1055 = vmatpush1.msra.mxu0 %v1054
    %1056 = vmatprep.subr.mxu0 0.0
    %1057 = vmatpush1.msra.mxu0 0.0
    %1058 = vmatprep.subr.mxu0 0.0
    %1059 = vmatpush1.msra.mxu0 0.0
    %1060 = vmatprep.subr.mxu0 0.0
    %1061 = vmatpush1.msra.mxu0 0.0
    %1062 = vmatprep.subr.mxu0 0.0
    %1063 = vmatpush1.msra.mxu0 0.0
    %1064 = vmatprep.subr.mxu0 0.0
    %1065 = vmatpush1.msra.mxu0 0.0
    %1066 = vmatprep.subr.mxu0 0.0
    %1067 = vmatpush1.msra.mxu0 0.0
    %1068 = vmatprep.subr.mxu0 0.0
    %1069 = vmatpush1.msra.mxu0 0.0
    %1070 = vmatprep.subr.mxu0 0.0
    %1071 = vmatpush1.msra.mxu0 0.0
    %1072 = vmatprep.subr.mxu0 0.0
    %1073 = vmatpush1.msra.mxu0 0.0
    %1074 = vmatprep.subr.mxu0 0.0
    %1075 = vmatpush1.msra.mxu0 0.0
    %1076 = vmatprep.subr.mxu0 0.0
    %1077 = vmatpush1.msra.mxu0 0.0
    %1078 = vmatprep.subr.mxu0 0.0
    %1079 = vmatpush1.msra.mxu0 0.0
    %1080 = vmatprep.subr.mxu0 0.0
    %1081 = vmatpush1.msra.mxu0 0.0
    %1082 = vmatprep.subr.mxu0 0.0
    %1083 = vmatpush1.msra.mxu0 0.0
    %1084 = vmatprep.subr.mxu0 0.0
    %1085 = vmatpush1.msra.mxu0 0.0
    %1086 = vmatprep.subr.mxu0 0.0
    %1087 = vmatpush1.msra.mxu0 0.0
    %1088 = vmatprep.mubr.f32.mxu0 0.0
    %v1089 = vand.u32 %v517, 4294901760
    %1090 = vmatmul.mubr.f32.gmra.mrb[0].mxu0 %v1089
    %v1091 = vpop.f32.mrb[0].mxu0
    %v1092 = vadd.f32 %v973, %v1091
    %v1093 = vpop.f32.mrb[0].mxu0
    %1094 = vdwg.mxu0
    %1095 = vmatprep.subr.mxu0 0.0
    %v1096 = vand.u32 %v518, 4294901760
    %1097 = vmatpush1.msra.mxu0 %v1096
    %1098 = vmatprep.subr.mxu0 0.0
    %v1099 = vand.u32 %v519, 4294901760
    %1100 = vmatpush1.msra.mxu0 %v1099
    %1101 = vmatprep.subr.mxu0 0.0
    %v1102 = vand.u32 %v520, 4294901760
    %1103 = vmatpush1.msra.mxu0 %v1102
    %1104 = vmatprep.subr.mxu0 0.0
    %v1105 = vand.u32 %v521, 4294901760
    %1106 = vmatpush1.msra.mxu0 %v1105
    %1107 = vmatprep.subr.mxu0 0.0
    %v1108 = vand.u32 %v522, 4294901760
    %1109 = vmatpush1.msra.mxu0 %v1108
    %1110 = vmatprep.subr.mxu0 0.0
    %v1111 = vand.u32 %v523, 4294901760
    %1112 = vmatpush1.msra.mxu0 %v1111
    %1113 = vmatprep.subr.mxu0 0.0
    %v1114 = vand.u32 %v524, 4294901760
    %1115 = vmatpush1.msra.mxu0 %v1114
    %1116 = vmatprep.subr.mxu0 0.0
    %v1117 = vand.u32 %v525, 4294901760
    %1118 = vmatpush1.msra.mxu0 %v1117
    %1119 = vmatprep.subr.mxu0 0.0
    %v1120 = vand.u32 %v526, 4294901760
    %1121 = vmatpush1.msra.mxu0 %v1120
    %1122 = vmatprep.subr.mxu0 0.0
    %v1123 = vand.u32 %v527, 4294901760
    %1124 = vmatpush1.msra.mxu0 %v1123
    %1125 = vmatprep.subr.mxu0 0.0
    %v1126 = vand.u32 %v528, 4294901760
    %1127 = vmatpush1.msra.mxu0 %v1126
    %1128 = vmatprep.subr.mxu0 0.0
    %v1129 = vand.u32 %v529, 4294901760
    %1130 = vmatpush1.msra.mxu0 %v1129
    %1131 = vmatprep.subr.mxu0 0.0
    %v1132 = vand.u32 %v530, 4294901760
    %1133 = vmatpush1.msra.mxu0 %v1132
    %1134 = vmatprep.subr.mxu0 0.0
    %v1135 = vand.u32 %v531, 4294901760
    %1136 = vmatpush1.msra.mxu0 %v1135
    %1137 = vmatprep.subr.mxu0 0.0
    %v1138 = vand.u32 %v532, 4294901760
    %1139 = vmatpush1.msra.mxu0 %v1138
    %1140 = vmatprep.subr.mxu0 0.0
    %v1141 = vand.u32 %v533, 4294901760
    %1142 = vmatpush1.msra.mxu0 %v1141
    %1143 = vmatprep.subr.mxu0 0.0
    %1144 = vmatpush1.msra.mxu0 0.0
    %1145 = vmatprep.subr.mxu0 0.0
    %1146 = vmatpush1.msra.mxu0 0.0
    %1147 = vmatprep.subr.mxu0 0.0
    %1148 = vmatpush1.msra.mxu0 0.0
    %1149 = vmatprep.subr.mxu0 0.0
    %1150 = vmatpush1.msra.mxu0 0.0
    %1151 = vmatprep.subr.mxu0 0.0
    %1152 = vmatpush1.msra.mxu0 0.0
    %1153 = vmatprep.subr.mxu0 0.0
    %1154 = vmatpush1.msra.mxu0 0.0
    %1155 = vmatprep.subr.mxu0 0.0
    %1156 = vmatpush1.msra.mxu0 0.0
    %1157 = vmatprep.subr.mxu0 0.0
    %1158 = vmatpush1.msra.mxu0 0.0
    %1159 = vmatprep.subr.mxu0 0.0
    %1160 = vmatpush1.msra.mxu0 0.0
    %1161 = vmatprep.subr.mxu0 0.0
    %1162 = vmatpush1.msra.mxu0 0.0
    %1163 = vmatprep.subr.mxu0 0.0
    %1164 = vmatpush1.msra.mxu0 0.0
    %1165 = vmatprep.subr.mxu0 0.0
    %1166 = vmatpush1.msra.mxu0 0.0
    %1167 = vmatprep.subr.mxu0 0.0
    %1168 = vmatpush1.msra.mxu0 0.0
    %1169 = vmatprep.subr.mxu0 0.0
    %1170 = vmatpush1.msra.mxu0 0.0
    %1171 = vmatprep.subr.mxu0 0.0
    %1172 = vmatpush1.msra.mxu0 0.0
    %1173 = vmatprep.subr.mxu0 0.0
    %1174 = vmatpush1.msra.mxu0 0.0
    %1175 = vmatprep.mubr.f32.mxu0 0.0
    %v1176 = vand.u32 %v517, 4294901760
    %1177 = vmatmul.mubr.f32.gmra.mrb[0].mxu0 %v1176
    %v1178 = vpop.f32.mrb[0].mxu0
    %v1179 = vadd.f32 %v1092, %v1178
    %v1180 = vpop.f32.mrb[0].mxu0
    %1181 = vdwg.mxu0
    %1182 = vst [vmem:[#allocation8] sm:$0x3] %v1179
    // Predicated region
    $region34: #{tpu_custom_call.1} parent=1 // pred_check
      _
    $region35: #{tpu_custom_call.1} parent=1 // pred_check_branch
      %1184 = sbr.rel (0) target = $region37
    $region36: #{tpu_custom_call.1} parent=1 // pred_region
      %s1186 = ssub.s32 32, 32
      %1187 = vsyncadd [#allocation4], %s1186
      %s1189 = sshll.u32 [#allocation8], 4
      %s1190 = int_to_ptr.vmem [resolvable:$true] %s1189
      %1192 = dma.vmem_to_hbm [thread:$0]  %s1190, 32, %s5, [#allocation4]
    $region37: #{tpu_custom_call.1} parent=1 // pred_fallthru
      _
    // Predicated region
    $region38: #{tpu_custom_call.1} parent=1 // pred_check
      _
    $region39: #{tpu_custom_call.1} parent=1 // pred_check_branch
      %1194 = sbr.rel (0) target = $region41
    $region40: #{tpu_custom_call.1} parent=1 // pred_region
      %1195 = dma.done [#allocation4], 32
    $region41: #{tpu_custom_call.1} parent=1 // pred_fallthru
      _
    %1196 = vsyncpa [#allocation3], 1
    %1197 = vsyncpa [#allocation6], 1
    %1198 = vsyncpa [#allocation4], 1

</llo_original>
